<compile_context>
chip_gen: v5e
topology: v5e:2x2
jax: 0.10.0
libtpu: 0.0.40
codegen_flags: <defaults>
</compile_context>

<pallas_src>
import functools

import jax
import jax.numpy as jnp
from jax import lax
from jax.experimental import pallas as pl
from jax.experimental.pallas import tpu as pltpu

_MIB = 1024 * 1024


# ----------------------------- Pallas kernel ------------------------------

def _separable_nl_spatial_kernel(exp_in_bf16,
                                 at_ref, bt_ref, dt_ref,
                                 ac_ref, bc_ref, dc_ref,
                                 x_ref, o_ref):
    """One (batch, q-tile) grid step.

    at/ac : (1, tq, NC)  bf16   query rows (1/scale folded into conv weights)
    bt/bc : (1, NC, HW)  bf16   keys       (resident across q tiles)
    dt/dc : (1, NC, HW)  bf16   values     (lane-dense layout)
    x     : (1, NC, tq)  f32    residual tile
    o     : (1, NC, tq)  f32    E1T + E1C + x for this q tile (lane-dense)
    """

    def branch(a_ref, b_ref, d_ref):
        # Scores on the MXU: bf16 x bf16 with f32 accumulation.
        s = jnp.dot(a_ref[0], b_ref[0],
                    preferred_element_type=jnp.float32)            # (tq, HW)
        m = jnp.max(s, axis=-1, keepdims=True)
        if exp_in_bf16:
            # EUP-saving path for v6e/v7x when NC is small (EUP-bound regime);
            # row sums still accumulate in f32.
            e = jnp.exp((s - m).astype(jnp.bfloat16))               # (tq, HW)
            l = jnp.sum(e, axis=-1, keepdims=True, dtype=jnp.float32)
            eb = e
        else:
            e = jnp.exp(s - m)                                      # f32 (v5e-safe)
            l = jnp.sum(e, axis=-1, keepdims=True)                  # (tq, 1) f32
            eb = e.astype(jnp.bfloat16)
        inv_l = pl.reciprocal(l, approx=True)                       # EUP slot
        # Post-normalized softmax: value matmul on the unnormalized exp tile,
        # then scale only the small (NC, tq) result.
        # E^T tile: (NC, tq) = D (NC, HW) . P^T  (rhs-transposed dot -> no
        # in-kernel transpose of the score-sized tile, lane-dense output).
        o = lax.dot_general(
            d_ref[0], eb,
            dimension_numbers=(((1,), (1,)), ((), ())),
            preferred_element_type=jnp.float32)                     # (NC, tq)
        return o * jnp.transpose(inv_l)                             # * (1, tq)

    # Sequence the branches through the output tile so the first branch's
    # (tq, HW) f32 temporaries are dead before the second branch allocates its
    # own (the extra (NC, tq) store/load is cheap).  Residual fused here too.
    o_ref[0] = x_ref[0] + branch(at_ref, bt_ref, dt_ref)
    o_ref[0] = o_ref[0] + branch(ac_ref, bc_ref, dc_ref)


# ------------------------ tiling / VMEM budgeting --------------------------

def _vmem_capacity_bytes():
    try:
        info = pltpu.get_tpu_info()
        cap = getattr(info, "vmem_capacity_bytes", None)
        if cap:
            return int(cap)
    except Exception:
        pass
    return 64 * _MIB  # conservative default (v7x-sized part)


def _vmem_estimate(tq, hw, nc, kv_nbuf):
    bf16, f32 = 2, 4
    score_tmp = 3 * tq * hw * f32               # s + e (+ slack); one branch live
    a_bufs = 2 * 2 * tq * nc * bf16             # two A operands, double-buffered
    kv_bufs = 4 * kv_nbuf * nc * hw * bf16      # four resident key/value operands
    xo_bufs = 2 * 2 * nc * tq * f32             # residual + output tiles
    misc = 2 * _MIB                             # compiler scratch headroom
    return score_tmp + a_bufs + kv_bufs + xo_bufs + misc


def _choose_tiling(hw, nc, budget):
    # q-tile candidates: divisors of HW that are multiples of 8 (sublane), so
    # ragged spatial sizes (e.g. HW = 56*56 -> tq = 448) never fall back to a
    # full (HW, HW) score tile.
    cands = sorted(
        (d for d in range(8, min(hw, 1024) + 1, 8) if hw % d == 0),
        reverse=True)
    if not cands:
        cands = [hw]                            # tiny HW: single full block
    for kv_nbuf in (2, 1):                      # drop to Buffered(1) K/V last
        for tq in cands:
            if _vmem_estimate(tq, hw, nc, kv_nbuf) <= budget:
                return tq, kv_nbuf
    return cands[-1], 1                         # best effort for huge shapes


# ------------------------------ pallas_call --------------------------------

def separable_nl_attention(a_t, b_t, d_t, a_c, b_c, d_c, x_res,
                           *, exp_in_bf16=False):
    """a_*: (B, HW, NC) bf16; b_*, d_*: (B, NC, HW) bf16; x_res: (B, NC, HW) f32.

    Returns E1T + E1C + x in lane-dense (B, NC, HW) f32."""
    B, HW, NC = a_t.shape

    capacity = _vmem_capacity_bytes()
    # Headroom for compiler scratch / pipeline bookkeeping: ~56 MiB usable on
    # a 64 MiB part (v7x), ~112 MiB on 128 MiB parts (v5e/v6e).
    budget = capacity - max(8 * _MIB, capacity // 8)
    tq, kv_nbuf = _choose_tiling(HW, NC, budget)
    n_q = HW // tq

    a_spec = pl.BlockSpec((1, tq, NC), lambda b, q: (b, q, 0))
    if kv_nbuf == 2:
        kv_spec = pl.BlockSpec((1, NC, HW), lambda b, q: (b, 0, 0))
    else:
        # VMEM-constrained: single-buffer the resident keys/values; the exposed
        # DMA at each batch boundary is amortized over n_q q-tiles.
        kv_spec = pl.BlockSpec((1, NC, HW), lambda b, q: (b, 0, 0),
                               pipeline_mode=pl.Buffered(1))
    xo_spec = pl.BlockSpec((1, NC, tq), lambda b, q: (b, 0, q))

    est = _vmem_estimate(tq, HW, NC, kv_nbuf)
    vmem_limit = int(min(capacity - 4 * _MIB,
                         max(32 * _MIB, est + est // 4)))

    bf16, f32 = 2, 4
    cost = pl.CostEstimate(
        flops=8 * B * HW * HW * NC,             # 2 branches x 2 matmuls
        transcendentals=2 * B * HW * HW,        # exp over the score tiles
        bytes_accessed=6 * B * NC * HW * bf16 + 2 * B * NC * HW * f32,
    )

    kernel = functools.partial(_separable_nl_spatial_kernel, exp_in_bf16)

    # TODO(synk): verify in the Mosaic bundle that the D @ P^T dot_general
    # lowers without an explicit vxpose of the (tq, HW) tile (expected).
    return pl.pallas_call(
        kernel,
        out_shape=jax.ShapeDtypeStruct((B, NC, HW), jnp.float32),
        grid_spec=pltpu.PrefetchScalarGridSpec(
            num_scalar_prefetch=0,
            grid=(B, n_q),
            in_specs=[a_spec, kv_spec, kv_spec, a_spec, kv_spec, kv_spec,
                      xo_spec],
            out_specs=xo_spec,
        ),
        compiler_params=pltpu.CompilerParams(
            dimension_semantics=("parallel", "parallel"),
            vmem_limit_bytes=vmem_limit,
        ),
        cost_estimate=cost,
    )(a_t, b_t, d_t, a_c, b_c, d_c, x_res)


# ---------------- glue: 1x1x1 convs (linear mixes) + reshapes ----------------

def _conv_T_nchw(x, wb):
    # Conv3d over the frame axis N of x:(B,N,C,H,W); flattened (B, N*C, H*W).
    w, b = wb
    y = jnp.einsum('mn,bnchw->bmchw', w, x) + b[None, :, None, None, None]
    B_, N, C, H, W = y.shape
    return y.reshape(B_, N * C, H * W)


def _conv_C_nchw(x, wb):
    # Conv3d over the channel axis C; flattened (B, N*C, H*W).
    w, b = wb
    y = jnp.einsum('dc,bnchw->bndhw', w, x) + b[None, None, :, None, None]
    B_, N, C, H, W = y.shape
    return y.reshape(B_, N * C, H * W)


def _conv_T_hwnc(x, wb):
    # Same conv, produced directly in (B, H*W, N*C) layout (fused by XLA,
    # no separate HBM transpose pass).
    w, b = wb
    y = jnp.einsum('mn,bnchw->bhwmc', w, x) + b[None, None, None, :, None]
    B_, H, W, N, C = y.shape
    return y.reshape(B_, H * W, N * C)


def _conv_C_hwnc(x, wb):
    w, b = wb
    y = jnp.einsum('dc,bnchw->bhwnd', w, x) + b
    B_, H, W, N, C = y.shape
    return y.reshape(B_, H * W, N * C)


def separable_nl_spatial_forward(x, params, *, exp_in_bf16=False):
    B, N, C, H, W = x.shape
    bf = jnp.bfloat16
    inv_scale = 1.0 / float(params["scale"])

    def _scaled(wb):
        w, b = wb
        return w * inv_scale, b * inv_scale

    # 1/scale folded into the A-projection conv weights (one-time (ch, ch)
    # scaling fused into the conv einsum): no in-kernel multiply, no extra
    # bf16 rounding of A.
    A1T = _conv_T_hwnc(x, _scaled(params["A1T"])).astype(bf)
    A1C = _conv_C_hwnc(x, _scaled(params["A1C"])).astype(bf)
    B1T = _conv_T_nchw(x, params["B1T"]).astype(bf)
    B1C = _conv_C_nchw(x, params["B1C"]).astype(bf)
    D1T = _conv_T_nchw(x, params["D1T"]).astype(bf)
    D1C = _conv_C_nchw(x, params["D1C"]).astype(bf)

    # Residual in the kernel's lane-dense (B, NC, HW) layout (pure reshape).
    x_res = x.reshape(B, N * C, H * W).astype(jnp.float32)

    E = separable_nl_attention(A1T, B1T, D1T, A1C, B1C, D1C, x_res,
                               exp_in_bf16=exp_in_bf16)
    # (B, NC, HW) -> (B, N, C, H, W): pure reshape; residual already fused.
    return E.reshape(B, N, C, H, W)


# ---------------- pure-JAX f32 reference (for a sanity check) ----------------

def separable_nl_spatial_reference(x, params):
    B, N, C, H, W = x.shape
    A1T = _conv_T_nchw(x, params["A1T"]).transpose(0, 2, 1)
    A1C = _conv_C_nchw(x, params["A1C"]).transpose(0, 2, 1)
    B1T = _conv_T_nchw(x, params["B1T"])
    B1C = _conv_C_nchw(x, params["B1C"])
    D1T = _conv_T_nchw(x, params["D1T"]).transpose(0, 2, 1)
    D1C = _conv_C_nchw(x, params["D1C"]).transpose(0, 2, 1)
    s = params["scale"]
    M1T = jax.nn.softmax(jnp.einsum('bqn,bnk->bqk', A1T, B1T) / s, axis=-1)
    M1C = jax.nn.softmax(jnp.einsum('bqn,bnk->bqk', A1C, B1C) / s, axis=-1)
    E1T = jnp.einsum('bqk,bkn->bqn', M1T, D1T)
    E1C = jnp.einsum('bqk,bkn->bqn', M1C, D1C)
    E = (E1T + E1C).transpose(0, 2, 1).reshape(B, N, C, H, W)
    return E + x


# ---------------- parameter init (deterministic, synthetic) ----------------

def init_params(key, nf, num_frames):
    keys = jax.random.split(key, 12)

    def conv_params(kw, kb, ch):
        # 1x1x1 Conv3d(ch, ch): weight (ch, ch), bias (ch,)
        w = jax.random.normal(kw, (ch, ch), jnp.float32) / jnp.sqrt(float(ch))
        b = jax.random.normal(kb, (ch,), jnp.float32) * 0.01
        return w, b

    return {
        "A1T": conv_params(keys[0], keys[1], num_frames),
        "A1C": conv_params(keys[2], keys[3], nf),
        "B1T": conv_params(keys[4], keys[5], num_frames),
        "B1C": conv_params(keys[6], keys[7], nf),
        "D1T": conv_params(keys[8], keys[9], num_frames),
        "D1C": conv_params(keys[10], keys[11], nf),
        # scale = sqrt(sqrt(num_frames * 64)) as in the PyTorch __init__
        "scale": float(jnp.sqrt(jnp.sqrt(jnp.float32(num_frames * 64.0)))),
    }


if __name__ == "__main__":
    key = jax.random.PRNGKey(0)
    kx, kp = jax.random.split(key)

    # small shapes: batch=2, num_frames=4, nf=4, spatial 8x8
    B, N, C, H, W = 2, 4, 4, 8, 8
    x = jax.random.normal(kx, (B, N, C, H, W), jnp.float32)
    params = init_params(kp, nf=C, num_frames=N)

    fwd = jax.jit(lambda inp: separable_nl_spatial_forward(inp, params))
    out = jax.block_until_ready(fwd(x))
    assert out.shape == (B, N, C, H, W)
    assert out.dtype == jnp.float32

    ref = jax.block_until_ready(separable_nl_spatial_reference(x, params))
    max_err = float(jnp.max(jnp.abs(out - ref)))
    assert max_err < 1e-1, f"max abs err vs f32 reference: {max_err}"
    print("KERNEL_OK")
</pallas_src>

<mosaic_0001>
module attributes {stable_mosaic.version = 11 : i64} {
  func.func @_separable_nl_spatial_kernel(%arg0: i32, %arg1: i32, %arg2: memref<1x64x16xbf16, #tpu.memory_space<vmem>>, %arg3: memref<1x16x64xbf16, #tpu.memory_space<vmem>>, %arg4: memref<1x16x64xbf16, #tpu.memory_space<vmem>>, %arg5: memref<1x64x16xbf16, #tpu.memory_space<vmem>>, %arg6: memref<1x16x64xbf16, #tpu.memory_space<vmem>>, %arg7: memref<1x16x64xbf16, #tpu.memory_space<vmem>>, %arg8: memref<1x16x64xf32, #tpu.memory_space<vmem>>, %arg9: memref<1x16x64xf32, #tpu.memory_space<vmem>>) attributes {dimension_semantics = [#tpu.dimension_semantics<parallel>, #tpu.dimension_semantics<parallel>], iteration_bounds = array<i64: 2, 1>, scalar_prefetch = 0 : i64, scratch_operands = 0 : i64, tpu.core_type = #tpu.core_type<tc>, window_params = [{transform_indices = @transform_0, window_bounds = array<i64: 1, 64, 16>}, {transform_indices = @transform_1, window_bounds = array<i64: 1, 16, 64>}, {transform_indices = @transform_2, window_bounds = array<i64: 1, 16, 64>}, {transform_indices = @transform_3, window_bounds = array<i64: 1, 64, 16>}, {transform_indices = @transform_4, window_bounds = array<i64: 1, 16, 64>}, {transform_indices = @transform_5, window_bounds = array<i64: 1, 16, 64>}, {transform_indices = @transform_6, window_bounds = array<i64: 1, 16, 64>}, {transform_indices = @transform_7, window_bounds = array<i64: 1, 16, 64>}]} {
    %c0 = arith.constant 0 : index
    %c0_0 = arith.constant 0 : index
    %c0_1 = arith.constant 0 : index
    %0 = vector.load %arg8[%c0, %c0_0, %c0_1] : memref<1x16x64xf32, #tpu.memory_space<vmem>>, vector<1x16x64xf32>
    %1 = vector.shape_cast %0 : vector<1x16x64xf32> to vector<16x64xf32>
    %c0_2 = arith.constant 0 : index
    %c0_3 = arith.constant 0 : index
    %c0_4 = arith.constant 0 : index
    %2 = vector.load %arg2[%c0_2, %c0_3, %c0_4] : memref<1x64x16xbf16, #tpu.memory_space<vmem>>, vector<1x64x16xbf16>
    %3 = vector.shape_cast %2 : vector<1x64x16xbf16> to vector<64x16xbf16>
    %c0_5 = arith.constant 0 : index
    %c0_6 = arith.constant 0 : index
    %c0_7 = arith.constant 0 : index
    %4 = vector.load %arg3[%c0_5, %c0_6, %c0_7] : memref<1x16x64xbf16, #tpu.memory_space<vmem>>, vector<1x16x64xbf16>
    %5 = vector.shape_cast %4 : vector<1x16x64xbf16> to vector<16x64xbf16>
    %cst = arith.constant dense<0.000000e+00> : vector<64x64xf32>
    %6 = tpu.matmul %3, %5, %cst {dimension_numbers = #tpu.dot_dimension_numbers<[1], [0], [0], [1], [0, 0, 1, 1], [], []>} : vector<64x16xbf16>, vector<16x64xbf16>, vector<64x64xf32> -> vector<64x64xf32>
    %cst_8 = arith.constant dense<0xFF800000> : vector<64xf32>
    %7 = vector.multi_reduction <maximumf>, %6, %cst_8 [1] : vector<64x64xf32> to vector<64xf32>
    %8 = vector.shape_cast %7 : vector<64xf32> to vector<64x1xf32>
    %9 = vector.broadcast %8 : vector<64x1xf32> to vector<64x64xf32>
    %10 = arith.subf %6, %9 : vector<64x64xf32>
    %11 = math.exp %10 : vector<64x64xf32>
    %cst_9 = arith.constant dense<0.000000e+00> : vector<64xf32>
    %12 = vector.multi_reduction <add>, %11, %cst_9 [1] : vector<64x64xf32> to vector<64xf32>
    %13 = vector.shape_cast %12 : vector<64xf32> to vector<64x1xf32>
    %14 = arith.truncf %11 : vector<64x64xf32> to vector<64x64xbf16>
    %15 = tpu.reciprocal %13 {approx = true} : vector<64x1xf32> -> vector<64x1xf32>
    %c0_10 = arith.constant 0 : index
    %c0_11 = arith.constant 0 : index
    %c0_12 = arith.constant 0 : index
    %16 = vector.load %arg4[%c0_10, %c0_11, %c0_12] : memref<1x16x64xbf16, #tpu.memory_space<vmem>>, vector<1x16x64xbf16>
    %17 = vector.shape_cast %16 : vector<1x16x64xbf16> to vector<16x64xbf16>
    %cst_13 = arith.constant dense<0.000000e+00> : vector<16x64xf32>
    %18 = tpu.matmul %17, %14, %cst_13 {dimension_numbers = #tpu.dot_dimension_numbers<[1], [1], [0], [0], [0, 0, 1, 0], [], []>} : vector<16x64xbf16>, vector<64x64xbf16>, vector<16x64xf32> -> vector<16x64xf32>
    %19 = tpu.transpose %15, [1, 0] : vector<64x1xf32> -> vector<1x64xf32>
    %20 = vector.broadcast %19 : vector<1x64xf32> to vector<16x64xf32>
    %21 = arith.mulf %18, %20 : vector<16x64xf32>
    %22 = arith.addf %1, %21 : vector<16x64xf32>
    %c0_14 = arith.constant 0 : index
    %c0_15 = arith.constant 0 : index
    %c0_16 = arith.constant 0 : index
    %23 = vector.load %arg9[%c0_14, %c0_15, %c0_16] : memref<1x16x64xf32, #tpu.memory_space<vmem>>, vector<1x16x64xf32>
    %24 = vector.shape_cast %23 : vector<1x16x64xf32> to vector<16x64xf32>
    %25 = vector.shape_cast %22 : vector<16x64xf32> to vector<1x16x64xf32>
    tpu.vector_store %arg9[%c0_14, %c0_15, %c0_16], %25 {strides = array<i32>} : memref<1x16x64xf32, #tpu.memory_space<vmem>>, vector<1x16x64xf32>,
    %c0_17 = arith.constant 0 : index
    %c0_18 = arith.constant 0 : index
    %c0_19 = arith.constant 0 : index
    %26 = vector.load %arg9[%c0_17, %c0_18, %c0_19] : memref<1x16x64xf32, #tpu.memory_space<vmem>>, vector<1x16x64xf32>
    %27 = vector.shape_cast %26 : vector<1x16x64xf32> to vector<16x64xf32>
    %c0_20 = arith.constant 0 : index
    %c0_21 = arith.constant 0 : index
    %c0_22 = arith.constant 0 : index
    %28 = vector.load %arg5[%c0_20, %c0_21, %c0_22] : memref<1x64x16xbf16, #tpu.memory_space<vmem>>, vector<1x64x16xbf16>
    %29 = vector.shape_cast %28 : vector<1x64x16xbf16> to vector<64x16xbf16>
    %c0_23 = arith.constant 0 : index
    %c0_24 = arith.constant 0 : index
    %c0_25 = arith.constant 0 : index
    %30 = vector.load %arg6[%c0_23, %c0_24, %c0_25] : memref<1x16x64xbf16, #tpu.memory_space<vmem>>, vector<1x16x64xbf16>
    %31 = vector.shape_cast %30 : vector<1x16x64xbf16> to vector<16x64xbf16>
    %cst_26 = arith.constant dense<0.000000e+00> : vector<64x64xf32>
    %32 = tpu.matmul %29, %31, %cst_26 {dimension_numbers = #tpu.dot_dimension_numbers<[1], [0], [0], [1], [0, 0, 1, 1], [], []>} : vector<64x16xbf16>, vector<16x64xbf16>, vector<64x64xf32> -> vector<64x64xf32>
    %cst_27 = arith.constant dense<0xFF800000> : vector<64xf32>
    %33 = vector.multi_reduction <maximumf>, %32, %cst_27 [1] : vector<64x64xf32> to vector<64xf32>
    %34 = vector.shape_cast %33 : vector<64xf32> to vector<64x1xf32>
    %35 = vector.broadcast %34 : vector<64x1xf32> to vector<64x64xf32>
    %36 = arith.subf %32, %35 : vector<64x64xf32>
    %37 = math.exp %36 : vector<64x64xf32>
    %cst_28 = arith.constant dense<0.000000e+00> : vector<64xf32>
    %38 = vector.multi_reduction <add>, %37, %cst_28 [1] : vector<64x64xf32> to vector<64xf32>
    %39 = vector.shape_cast %38 : vector<64xf32> to vector<64x1xf32>
    %40 = arith.truncf %37 : vector<64x64xf32> to vector<64x64xbf16>
    %41 = tpu.reciprocal %39 {approx = true} : vector<64x1xf32> -> vector<64x1xf32>
    %c0_29 = arith.constant 0 : index
    %c0_30 = arith.constant 0 : index
    %c0_31 = arith.constant 0 : index
    %42 = vector.load %arg7[%c0_29, %c0_30, %c0_31] : memref<1x16x64xbf16, #tpu.memory_space<vmem>>, vector<1x16x64xbf16>
    %43 = vector.shape_cast %42 : vector<1x16x64xbf16> to vector<16x64xbf16>
    %cst_32 = arith.constant dense<0.000000e+00> : vector<16x64xf32>
    %44 = tpu.matmul %43, %40, %cst_32 {dimension_numbers = #tpu.dot_dimension_numbers<[1], [1], [0], [0], [0, 0, 1, 0], [], []>} : vector<16x64xbf16>, vector<64x64xbf16>, vector<16x64xf32> -> vector<16x64xf32>
    %45 = tpu.transpose %41, [1, 0] : vector<64x1xf32> -> vector<1x64xf32>
    %46 = vector.broadcast %45 : vector<1x64xf32> to vector<16x64xf32>
    %47 = arith.mulf %44, %46 : vector<16x64xf32>
    %48 = arith.addf %27, %47 : vector<16x64xf32>
    %c0_33 = arith.constant 0 : index
    %c0_34 = arith.constant 0 : index
    %c0_35 = arith.constant 0 : index
    %49 = vector.load %arg9[%c0_33, %c0_34, %c0_35] : memref<1x16x64xf32, #tpu.memory_space<vmem>>, vector<1x16x64xf32>
    %50 = vector.shape_cast %49 : vector<1x16x64xf32> to vector<16x64xf32>
    %51 = vector.shape_cast %48 : vector<16x64xf32> to vector<1x16x64xf32>
    tpu.vector_store %arg9[%c0_33, %c0_34, %c0_35], %51 {strides = array<i32>} : memref<1x16x64xf32, #tpu.memory_space<vmem>>, vector<1x16x64xf32>,
    return
  }
  func.func @transform_0(%arg0: i32, %arg1: i32) -> (i32, i32, i32) {
    %c0_i32 = arith.constant 0 : i32
    %c0_i32_0 = arith.constant 0 : i32
    return %arg0, %arg1, %c0_i32 : i32, i32, i32
  }
  func.func @transform_1(%arg0: i32, %arg1: i32) -> (i32, i32, i32) {
    %c0_i32 = arith.constant 0 : i32
    %c0_i32_0 = arith.constant 0 : i32
    %c0_i32_1 = arith.constant 0 : i32
    return %arg0, %c0_i32, %c0_i32_0 : i32, i32, i32
  }
  func.func @transform_2(%arg0: i32, %arg1: i32) -> (i32, i32, i32) {
    %c0_i32 = arith.constant 0 : i32
    %c0_i32_0 = arith.constant 0 : i32
    %c0_i32_1 = arith.constant 0 : i32
    return %arg0, %c0_i32, %c0_i32_0 : i32, i32, i32
  }
  func.func @transform_3(%arg0: i32, %arg1: i32) -> (i32, i32, i32) {
    %c0_i32 = arith.constant 0 : i32
    %c0_i32_0 = arith.constant 0 : i32
    return %arg0, %arg1, %c0_i32 : i32, i32, i32
  }
  func.func @transform_4(%arg0: i32, %arg1: i32) -> (i32, i32, i32) {
    %c0_i32 = arith.constant 0 : i32
    %c0_i32_0 = arith.constant 0 : i32
    %c0_i32_1 = arith.constant 0 : i32
    return %arg0, %c0_i32, %c0_i32_0 : i32, i32, i32
  }
  func.func @transform_5(%arg0: i32, %arg1: i32) -> (i32, i32, i32) {
    %c0_i32 = arith.constant 0 : i32
    %c0_i32_0 = arith.constant 0 : i32
    %c0_i32_1 = arith.constant 0 : i32
    return %arg0, %c0_i32, %c0_i32_0 : i32, i32, i32
  }
  func.func @transform_6(%arg0: i32, %arg1: i32) -> (i32, i32, i32) {
    %c0_i32 = arith.constant 0 : i32
    %c0_i32_0 = arith.constant 0 : i32
    return %arg0, %c0_i32, %arg1 : i32, i32, i32
  }
  func.func @transform_7(%arg0: i32, %arg1: i32) -> (i32, i32, i32) {
    %c0_i32 = arith.constant 0 : i32
    %c0_i32_0 = arith.constant 0 : i32
    return %arg0, %c0_i32, %arg1 : i32, i32, i32
  }
}

</mosaic_0001>

<llo_original>
// kernel: _lambda_.1
$region0: #{_lambda_.1}
  #allocation0 [shape = 'u32[]', space=smem, size = 0x4, offset = 0x4, fixed_abs, tag = 'smem constant byte address 0x4 - core index']
  #allocation1 [shape = 'u32[72,128]{1,0:T(1,128)}', space=vmem, size = 0x9000, scoped, tag = 'internal scratch']
  %s0 = inlined_call_operand.vmem [shape: bf16[2,64,16], index: 0, kind: input, shape index: {}]
  %s1 = inlined_call_operand.vmem [shape: bf16[2,16,64], index: 1, kind: input, shape index: {}]
  %s2 = inlined_call_operand.vmem [shape: bf16[2,16,64], index: 2, kind: input, shape index: {}]
  %s3 = inlined_call_operand.vmem [shape: bf16[2,64,16], index: 3, kind: input, shape index: {}]
  %s4 = inlined_call_operand.vmem [shape: bf16[2,16,64], index: 4, kind: input, shape index: {}]
  %s5 = inlined_call_operand.vmem [shape: bf16[2,16,64], index: 5, kind: input, shape index: {}]
  %s6 = inlined_call_operand.vmem [shape: f32[2,16,64], index: 6, kind: input, shape index: {}]
  %s7 = inlined_call_operand.vmem [shape: f32[2,16,64], index: 7, kind: output, shape index: {}]
  %s8 = sld [smem:[#allocation0]]
  $region61: #{_lambda_.1} parent=0
    _
  %s10 = ssub.s32 1, %s8
  %s11 = scalar_select 0, %s10, %s8
  loop: start=0, step=1, limit=4
  $region2: #{_lambda_.1} parent=0 // loop_pre_header
    _
  $region3: #{_lambda_.1} parent=0 // loop_header
    %s13 = sphi 0, %s17
    %p14 = scmp.ge.s32.totalorder %s13, 4
    %s20 = sphi 0, %s32
    %s21 = sphi 0, %s28
    %s22 = sphi 0, %s20
    %s23 = sphi 0, %s21
    %s24 = sphi 0, %s22
    %s25 = sphi 0, %s23
    %s37 = sphi 0, %s39
    %s40 = sphi 0, %s37
    %s41 = sphi 0, %s40
    %s57 = sphi 0, %s41
    %s63 = sphi 0, %s65
    %s66 = sphi 0, %s63
    %s67 = sphi 0, %s66
    %s83 = sphi 0, %s67
    %s89 = sphi 0, %s91
    %s92 = sphi 0, %s89
    %s93 = sphi 0, %s92
    %s109 = sphi 0, %s93
    %s117 = sphi 0, %s119
    %s120 = sphi 0, %s117
    %s121 = sphi 0, %s120
    %s137 = sphi 0, %s121
    %s143 = sphi 0, %s145
    %s146 = sphi 0, %s143
    %s147 = sphi 0, %s146
    %s163 = sphi 0, %s147
    %s169 = sphi 0, %s171
    %s172 = sphi 0, %s169
    %s173 = sphi 0, %s172
    %s189 = sphi 0, %s173
    %s197 = sphi 0, %s199
    %s200 = sphi 0, %s197
    %s201 = sphi 0, %s200
    %s217 = sphi 0, %s201
    %s225 = sphi 0, %s227
    %s228 = sphi 0, %s225
    %s229 = sphi 0, %s228
    %s245 = sphi 0, %s229
  $region4: #{_lambda_.1} parent=0 // loop_header_branch
    %16 = sbr.rel (%p14) target = $region8
  $region5: #{_lambda_.1} parent=0 // loop_body
    %s18 = ssub.s32 %s13, 1
    %s19 = ssub.s32 %s13, 2
    %s26 = sadd.s32 1, %s21
    %p27 = scmp.ge.s32.totalorder %s26, 1
    %s28 = scalar_select %p27, 0, %s26
    %s29 = sadd.s32 1, %s20
    %s30 = scalar_select %p27, %s29, %s20
    %p31 = scmp.ge.s32.totalorder %s30, 2
    %s32 = scalar_select %p31, 0, %s30
    %s33 = ssub.s32 %s20, %s32
    %s34 = ssub.s32 %s21, %s28
    %s35 = sor.u32 %s33, %s34
    %p36 = scmp.eq.s32.totalorder %s35, 0
    %s38 = sadd.s32 %s37, 1
    %s39 = scalar_select %p36, %s37, %s38
    %p42 = pneg %p36
    %p43 = scmp.eq.s32.totalorder %s13, 1
    %p44 = por %p42, %p43
    %p45 = scmp.ne.s32.totalorder %s37, %s40
    %p46 = scmp.eq.s32.totalorder %s13, 0
    %p47 = por %p45, %p46
    %p48 = scmp.ne.s32.totalorder %s37, %s40
    %p49 = scmp.eq.s32.totalorder %s18, 1
    %p50 = por %p48, %p49
    %p51 = scmp.ne.s32.totalorder %s40, %s41
    %p52 = scmp.eq.s32.totalorder %s18, 0
    %p53 = por %p51, %p52
    %p54 = scmp.ne.s32.totalorder %s40, %s41
    %p55 = scmp.eq.s32.totalorder %s19, 1
    %p56 = por %p54, %p55
    %p58 = scmp.ne.s32.totalorder %s41, %s57
    %p59 = scmp.eq.s32.totalorder %s19, 0
    %p60 = por %p58, %p59
    %s61 = ssub.s32 %s20, %s32
    %p62 = scmp.eq.s32.totalorder %s61, 0
    %s64 = sadd.s32 %s63, 1
    %s65 = scalar_select %p62, %s63, %s64
    %p68 = pneg %p62
    %p69 = scmp.eq.s32.totalorder %s13, 1
    %p70 = por %p68, %p69
    %p71 = scmp.ne.s32.totalorder %s63, %s66
    %p72 = scmp.eq.s32.totalorder %s13, 0
    %p73 = por %p71, %p72
    %p74 = scmp.ne.s32.totalorder %s63, %s66
    %p75 = scmp.eq.s32.totalorder %s18, 1
    %p76 = por %p74, %p75
    %p77 = scmp.ne.s32.totalorder %s66, %s67
    %p78 = scmp.eq.s32.totalorder %s18, 0
    %p79 = por %p77, %p78
    %p80 = scmp.ne.s32.totalorder %s66, %s67
    %p81 = scmp.eq.s32.totalorder %s19, 1
    %p82 = por %p80, %p81
    %p84 = scmp.ne.s32.totalorder %s67, %s83
    %p85 = scmp.eq.s32.totalorder %s19, 0
    %p86 = por %p84, %p85
    %s87 = ssub.s32 %s20, %s32
    %p88 = scmp.eq.s32.totalorder %s87, 0
    %s90 = sadd.s32 %s89, 1
    %s91 = scalar_select %p88, %s89, %s90
    %p94 = pneg %p88
    %p95 = scmp.eq.s32.totalorder %s13, 1
    %p96 = por %p94, %p95
    %p97 = scmp.ne.s32.totalorder %s89, %s92
    %p98 = scmp.eq.s32.totalorder %s13, 0
    %p99 = por %p97, %p98
    %p100 = scmp.ne.s32.totalorder %s89, %s92
    %p101 = scmp.eq.s32.totalorder %s18, 1
    %p102 = por %p100, %p101
    %p103 = scmp.ne.s32.totalorder %s92, %s93
    %p104 = scmp.eq.s32.totalorder %s18, 0
    %p105 = por %p103, %p104
    %p106 = scmp.ne.s32.totalorder %s92, %s93
    %p107 = scmp.eq.s32.totalorder %s19, 1
    %p108 = por %p106, %p107
    %p110 = scmp.ne.s32.totalorder %s93, %s109
    %p111 = scmp.eq.s32.totalorder %s19, 0
    %p112 = por %p110, %p111
    %s113 = ssub.s32 %s20, %s32
    %s114 = ssub.s32 %s21, %s28
    %s115 = sor.u32 %s113, %s114
    %p116 = scmp.eq.s32.totalorder %s115, 0
    %s118 = sadd.s32 %s117, 1
    %s119 = scalar_select %p116, %s117, %s118
    %p122 = pneg %p116
    %p123 = scmp.eq.s32.totalorder %s13, 1
    %p124 = por %p122, %p123
    %p125 = scmp.ne.s32.totalorder %s117, %s120
    %p126 = scmp.eq.s32.totalorder %s13, 0
    %p127 = por %p125, %p126
    %p128 = scmp.ne.s32.totalorder %s117, %s120
    %p129 = scmp.eq.s32.totalorder %s18, 1
    %p130 = por %p128, %p129
    %p131 = scmp.ne.s32.totalorder %s120, %s121
    %p132 = scmp.eq.s32.totalorder %s18, 0
    %p133 = por %p131, %p132
    %p134 = scmp.ne.s32.totalorder %s120, %s121
    %p135 = scmp.eq.s32.totalorder %s19, 1
    %p136 = por %p134, %p135
    %p138 = scmp.ne.s32.totalorder %s121, %s137
    %p139 = scmp.eq.s32.totalorder %s19, 0
    %p140 = por %p138, %p139
    %s141 = ssub.s32 %s20, %s32
    %p142 = scmp.eq.s32.totalorder %s141, 0
    %s144 = sadd.s32 %s143, 1
    %s145 = scalar_select %p142, %s143, %s144
    %p148 = pneg %p142
    %p149 = scmp.eq.s32.totalorder %s13, 1
    %p150 = por %p148, %p149
    %p151 = scmp.ne.s32.totalorder %s143, %s146
    %p152 = scmp.eq.s32.totalorder %s13, 0
    %p153 = por %p151, %p152
    %p154 = scmp.ne.s32.totalorder %s143, %s146
    %p155 = scmp.eq.s32.totalorder %s18, 1
    %p156 = por %p154, %p155
    %p157 = scmp.ne.s32.totalorder %s146, %s147
    %p158 = scmp.eq.s32.totalorder %s18, 0
    %p159 = por %p157, %p158
    %p160 = scmp.ne.s32.totalorder %s146, %s147
    %p161 = scmp.eq.s32.totalorder %s19, 1
    %p162 = por %p160, %p161
    %p164 = scmp.ne.s32.totalorder %s147, %s163
    %p165 = scmp.eq.s32.totalorder %s19, 0
    %p166 = por %p164, %p165
    %s167 = ssub.s32 %s20, %s32
    %p168 = scmp.eq.s32.totalorder %s167, 0
    %s170 = sadd.s32 %s169, 1
    %s171 = scalar_select %p168, %s169, %s170
    %p174 = pneg %p168
    %p175 = scmp.eq.s32.totalorder %s13, 1
    %p176 = por %p174, %p175
    %p177 = scmp.ne.s32.totalorder %s169, %s172
    %p178 = scmp.eq.s32.totalorder %s13, 0
    %p179 = por %p177, %p178
    %p180 = scmp.ne.s32.totalorder %s169, %s172
    %p181 = scmp.eq.s32.totalorder %s18, 1
    %p182 = por %p180, %p181
    %p183 = scmp.ne.s32.totalorder %s172, %s173
    %p184 = scmp.eq.s32.totalorder %s18, 0
    %p185 = por %p183, %p184
    %p186 = scmp.ne.s32.totalorder %s172, %s173
    %p187 = scmp.eq.s32.totalorder %s19, 1
    %p188 = por %p186, %p187
    %p190 = scmp.ne.s32.totalorder %s173, %s189
    %p191 = scmp.eq.s32.totalorder %s19, 0
    %p192 = por %p190, %p191
    %s193 = ssub.s32 %s20, %s32
    %s194 = ssub.s32 %s21, %s28
    %s195 = sor.u32 %s193, %s194
    %p196 = scmp.eq.s32.totalorder %s195, 0
    %s198 = sadd.s32 %s197, 1
    %s199 = scalar_select %p196, %s197, %s198
    %p202 = pneg %p196
    %p203 = scmp.eq.s32.totalorder %s13, 1
    %p204 = por %p202, %p203
    %p205 = scmp.ne.s32.totalorder %s197, %s200
    %p206 = scmp.eq.s32.totalorder %s13, 0
    %p207 = por %p205, %p206
    %p208 = scmp.ne.s32.totalorder %s197, %s200
    %p209 = scmp.eq.s32.totalorder %s18, 1
    %p210 = por %p208, %p209
    %p211 = scmp.ne.s32.totalorder %s200, %s201
    %p212 = scmp.eq.s32.totalorder %s18, 0
    %p213 = por %p211, %p212
    %p214 = scmp.ne.s32.totalorder %s200, %s201
    %p215 = scmp.eq.s32.totalorder %s19, 1
    %p216 = por %p214, %p215
    %p218 = scmp.ne.s32.totalorder %s201, %s217
    %p219 = scmp.eq.s32.totalorder %s19, 0
    %p220 = por %p218, %p219
    %s221 = ssub.s32 %s20, %s32
    %s222 = ssub.s32 %s21, %s28
    %s223 = sor.u32 %s221, %s222
    %p224 = scmp.eq.s32.totalorder %s223, 0
    %s226 = sadd.s32 %s225, 1
    %s227 = scalar_select %p224, %s225, %s226
    %p230 = pneg %p224
    %p231 = scmp.eq.s32.totalorder %s13, 1
    %p232 = por %p230, %p231
    %p233 = scmp.ne.s32.totalorder %s225, %s228
    %p234 = scmp.eq.s32.totalorder %s13, 0
    %p235 = por %p233, %p234
    %p236 = scmp.ne.s32.totalorder %s225, %s228
    %p237 = scmp.eq.s32.totalorder %s18, 1
    %p238 = por %p236, %p237
    %p239 = scmp.ne.s32.totalorder %s228, %s229
    %p240 = scmp.eq.s32.totalorder %s18, 0
    %p241 = por %p239, %p240
    %p242 = scmp.ne.s32.totalorder %s228, %s229
    %p243 = scmp.eq.s32.totalorder %s19, 1
    %p244 = por %p242, %p243
    %p246 = scmp.ne.s32.totalorder %s229, %s245
    %p247 = scmp.eq.s32.totalorder %s19, 0
    %p248 = por %p246, %p247
    %p249 = scmp.le.s32.totalorder 1, %s13
    %p250 = scmp.lt.s32.totalorder %s13, 3
    %p251 = pnand %p249, %p250
    %p252 = pneg %p251
    // Predicated region
    $region9: #{_lambda_.1} parent=5 // pred_check
      _
    $region10: #{_lambda_.1} parent=5 // pred_check_branch
      %254 = sbr.rel (%p251) target = $region12
    $region11: #{_lambda_.1} parent=5 // pred_region
      %s255 = ssub.s32 %s13, 1
    $region12: #{_lambda_.1} parent=5 // pred_fallthru
      _
    %p256 = scmp.lt.s32.totalorder %s13, 2
    // Predicated region
    $region13: #{_lambda_.1} parent=5 // pred_check
      %p257 = pneg %p256
    $region14: #{_lambda_.1} parent=5 // pred_check_branch
      %259 = sbr.rel (%p257) target = $region16
    $region15: #{_lambda_.1} parent=5 // pred_region
      // Predicated region
      $region17: #{_lambda_.1} parent=15 // pred_check
        %p260 = pneg %p47
      $region18: #{_lambda_.1} parent=15 // pred_check_branch
        %262 = sbr.rel (%p260) target = $region20
      $region19: #{_lambda_.1} parent=15 // pred_region
        %s263 = smul.u32 8, %s21
        %p264 = scmp.lt.s32.totalorder %s20, 1
        %s265 = scalar_select %p264, %s20, 1
        %p266 = scmp.lt.s32.totalorder %s263, 7
        %s267 = scalar_select %p266, %s263, 7
        %s268 = smul.addr %s265, 8
        %s269 = sadd.s32 %s267, %s268
        %s270 = smul.addr %s269, 4
        %s271 = scalar_lea.vmem %s0, %s270
        %s272 = smul.u32 8, %s21
      $region20: #{_lambda_.1} parent=15 // pred_fallthru
        _
      // Predicated region
      $region21: #{_lambda_.1} parent=15 // pred_check
        %p273 = pneg %p73
      $region22: #{_lambda_.1} parent=15 // pred_check_branch
        %275 = sbr.rel (%p273) target = $region24
      $region23: #{_lambda_.1} parent=15 // pred_region
        %p276 = scmp.lt.s32.totalorder %s20, 1
        %s277 = scalar_select %p276, %s20, 1
        %s278 = smul.addr %s277, 2
        %s279 = smul.addr %s278, 4
        %s280 = scalar_lea.vmem %s1, %s279
      $region24: #{_lambda_.1} parent=15 // pred_fallthru
        _
      // Predicated region
      $region25: #{_lambda_.1} parent=15 // pred_check
        %p281 = pneg %p99
      $region26: #{_lambda_.1} parent=15 // pred_check_branch
        %283 = sbr.rel (%p281) target = $region28
      $region27: #{_lambda_.1} parent=15 // pred_region
        %p284 = scmp.lt.s32.totalorder %s20, 1
        %s285 = scalar_select %p284, %s20, 1
        %s286 = smul.addr %s285, 2
        %s287 = smul.addr %s286, 4
        %s288 = scalar_lea.vmem %s2, %s287
      $region28: #{_lambda_.1} parent=15 // pred_fallthru
        _
      // Predicated region
      $region29: #{_lambda_.1} parent=15 // pred_check
        %p289 = pneg %p127
      $region30: #{_lambda_.1} parent=15 // pred_check_branch
        %291 = sbr.rel (%p289) target = $region32
      $region31: #{_lambda_.1} parent=15 // pred_region
        %s292 = smul.u32 8, %s21
        %p293 = scmp.lt.s32.totalorder %s20, 1
        %s294 = scalar_select %p293, %s20, 1
        %p295 = scmp.lt.s32.totalorder %s292, 7
        %s296 = scalar_select %p295, %s292, 7
        %s297 = smul.addr %s294, 8
        %s298 = sadd.s32 %s296, %s297
        %s299 = smul.addr %s298, 4
        %s300 = scalar_lea.vmem %s3, %s299
        %s301 = smul.u32 8, %s21
      $region32: #{_lambda_.1} parent=15 // pred_fallthru
        _
      // Predicated region
      $region33: #{_lambda_.1} parent=15 // pred_check
        %p302 = pneg %p153
      $region34: #{_lambda_.1} parent=15 // pred_check_branch
        %304 = sbr.rel (%p302) target = $region36
      $region35: #{_lambda_.1} parent=15 // pred_region
        %p305 = scmp.lt.s32.totalorder %s20, 1
        %s306 = scalar_select %p305, %s20, 1
        %s307 = smul.addr %s306, 2
        %s308 = smul.addr %s307, 4
        %s309 = scalar_lea.vmem %s4, %s308
      $region36: #{_lambda_.1} parent=15 // pred_fallthru
        _
      // Predicated region
      $region37: #{_lambda_.1} parent=15 // pred_check
        %p310 = pneg %p179
      $region38: #{_lambda_.1} parent=15 // pred_check_branch
        %312 = sbr.rel (%p310) target = $region40
      $region39: #{_lambda_.1} parent=15 // pred_region
        %p313 = scmp.lt.s32.totalorder %s20, 1
        %s314 = scalar_select %p313, %s20, 1
        %s315 = smul.addr %s314, 2
        %s316 = smul.addr %s315, 4
        %s317 = scalar_lea.vmem %s5, %s316
      $region40: #{_lambda_.1} parent=15 // pred_fallthru
        _
      // Predicated region
      $region41: #{_lambda_.1} parent=15 // pred_check
        %p318 = pneg %p207
      $region42: #{_lambda_.1} parent=15 // pred_check_branch
        %320 = sbr.rel (%p318) target = $region44
      $region43: #{_lambda_.1} parent=15 // pred_region
        %p321 = scmp.lt.s32.totalorder %s20, 1
        %s322 = scalar_select %p321, %s20, 1
        %p323 = scmp.lt.s32.totalorder %s21, 0
        %s324 = scalar_select %p323, %s21, 0
        %s325 = smul.addr %s322, 2
        %s326 = sadd.s32 %s324, %s325
        %s327 = smul.addr %s326, 8
        %s328 = scalar_lea.vmem %s6, %s327
      $region44: #{_lambda_.1} parent=15 // pred_fallthru
        _
    $region16: #{_lambda_.1} parent=5 // pred_fallthru
      _
    %p329 = scmp.le.s32.totalorder 1, %s13
    %p330 = scmp.lt.s32.totalorder %s13, 3
    %p331 = pnand %p329, %p330
    %p332 = pneg %p331
    // Predicated region
    $region45: #{_lambda_.1} parent=5 // pred_check
      _
    $region46: #{_lambda_.1} parent=5 // pred_check_branch
      %334 = sbr.rel (%p331) target = $region48
    $region47: #{_lambda_.1} parent=5 // pred_region
      %s335 = ssub.s32 %s13, 1
      %s336 = smul.u32 8, %s23
      %p337 = scmp.lt.s32.totalorder %s22, 1
      %s338 = scalar_select %p337, %s22, 1
      %p339 = scmp.lt.s32.totalorder %s336, 7
      %s340 = scalar_select %p339, %s336, 7
      %s341 = smul.addr %s338, 8
      %s342 = sadd.s32 %s340, %s341
      %s343 = smul.addr %s342, 4
      %s344 = scalar_lea.vmem %s0, %s343
      %p345 = pneg %p53
      %p346 = pneg %p50
      %p347 = scmp.lt.s32.totalorder %s22, 1
      %s348 = scalar_select %p347, %s22, 1
      %s349 = smul.addr %s348, 2
      %s350 = smul.addr %s349, 4
      %s351 = scalar_lea.vmem %s1, %s350
      %p352 = pneg %p79
      %p353 = pneg %p76
      %p354 = scmp.lt.s32.totalorder %s22, 1
      %s355 = scalar_select %p354, %s22, 1
      %s356 = smul.addr %s355, 2
      %s357 = smul.addr %s356, 4
      %s358 = scalar_lea.vmem %s2, %s357
      %p359 = pneg %p105
      %p360 = pneg %p102
      %s361 = smul.u32 8, %s23
      %p362 = scmp.lt.s32.totalorder %s22, 1
      %s363 = scalar_select %p362, %s22, 1
      %p364 = scmp.lt.s32.totalorder %s361, 7
      %s365 = scalar_select %p364, %s361, 7
      %s366 = smul.addr %s363, 8
      %s367 = sadd.s32 %s365, %s366
      %s368 = smul.addr %s367, 4
      %s369 = scalar_lea.vmem %s3, %s368
      %p370 = pneg %p133
      %p371 = pneg %p130
      %p372 = scmp.lt.s32.totalorder %s22, 1
      %s373 = scalar_select %p372, %s22, 1
      %s374 = smul.addr %s373, 2
      %s375 = smul.addr %s374, 4
      %s376 = scalar_lea.vmem %s4, %s375
      %p377 = pneg %p159
      %p378 = pneg %p156
      %p379 = scmp.lt.s32.totalorder %s22, 1
      %s380 = scalar_select %p379, %s22, 1
      %s381 = smul.addr %s380, 2
      %s382 = smul.addr %s381, 4
      %s383 = scalar_lea.vmem %s5, %s382
      %p384 = pneg %p185
      %p385 = pneg %p182
      %p386 = scmp.lt.s32.totalorder %s22, 1
      %s387 = scalar_select %p386, %s22, 1
      %p388 = scmp.lt.s32.totalorder %s23, 0
      %s389 = scalar_select %p388, %s23, 0
      %s390 = smul.addr %s387, 2
      %s391 = sadd.s32 %s389, %s390
      %s392 = smul.addr %s391, 8
      %s393 = scalar_lea.vmem %s6, %s392
      %p394 = pneg %p213
      %p395 = pneg %p210
      %p396 = pneg %p241
      %p397 = pneg %p238
      %p398 = scmp.lt.s32.totalorder %s22, 1
      %s399 = scalar_select %p398, %s22, 1
      %p400 = scmp.lt.s32.totalorder %s23, 0
      %s401 = scalar_select %p400, %s23, 0
      %s402 = smul.addr %s399, 2
      %s403 = sadd.s32 %s401, %s402
      %s404 = smul.addr %s403, 8
      %s405 = scalar_lea.vmem %s7, %s404
      %s406 = smul.u32 8, %s23
      %p407 = scmp.lt.s32.totalorder %s22, 1
      %s408 = scalar_select %p407, %s22, 1
      %p409 = scmp.lt.s32.totalorder %s406, 7
      %s410 = scalar_select %p409, %s406, 7
      %s411 = smul.addr %s408, 8
      %s412 = sadd.s32 %s410, %s411
      %s413 = smul.addr %s412, 4
      %s414 = scalar_lea.vmem %s0, %s413
      %s415 = smul.u32 8, %s23
      %p416 = scmp.lt.s32.totalorder %s22, 1
      %s417 = scalar_select %p416, %s22, 1
      %s418 = smul.addr %s417, 2
      %s419 = smul.addr %s418, 4
      %s420 = scalar_lea.vmem %s1, %s419
      %p421 = scmp.lt.s32.totalorder %s22, 1
      %s422 = scalar_select %p421, %s22, 1
      %s423 = smul.addr %s422, 2
      %s424 = smul.addr %s423, 4
      %s425 = scalar_lea.vmem %s2, %s424
      %s426 = smul.u32 8, %s23
      %p427 = scmp.lt.s32.totalorder %s22, 1
      %s428 = scalar_select %p427, %s22, 1
      %p429 = scmp.lt.s32.totalorder %s426, 7
      %s430 = scalar_select %p429, %s426, 7
      %s431 = smul.addr %s428, 8
      %s432 = sadd.s32 %s430, %s431
      %s433 = smul.addr %s432, 4
      %s434 = scalar_lea.vmem %s3, %s433
      %s435 = smul.u32 8, %s23
      %p436 = scmp.lt.s32.totalorder %s22, 1
      %s437 = scalar_select %p436, %s22, 1
      %s438 = smul.addr %s437, 2
      %s439 = smul.addr %s438, 4
      %s440 = scalar_lea.vmem %s4, %s439
      %p441 = scmp.lt.s32.totalorder %s22, 1
      %s442 = scalar_select %p441, %s22, 1
      %s443 = smul.addr %s442, 2
      %s444 = smul.addr %s443, 4
      %s445 = scalar_lea.vmem %s5, %s444
      %p446 = scmp.lt.s32.totalorder %s22, 1
      %s447 = scalar_select %p446, %s22, 1
      %p448 = scmp.lt.s32.totalorder %s23, 0
      %s449 = scalar_select %p448, %s23, 0
      %s450 = smul.addr %s447, 2
      %s451 = sadd.s32 %s449, %s450
      %s452 = smul.addr %s451, 8
      %s453 = scalar_lea.vmem %s6, %s452
      %p454 = scmp.lt.s32.totalorder %s22, 1
      %s455 = scalar_select %p454, %s22, 1
      %p456 = scmp.lt.s32.totalorder %s23, 0
      %s457 = scalar_select %p456, %s23, 0
      %s458 = smul.addr %s455, 2
      %s459 = sadd.s32 %s457, %s458
      %s460 = smul.addr %s459, 8
      %s461 = scalar_lea.vmem %s7, %s460
      %v463 = vld [vmem:[%s453] sm:$0xff]
      %v464 = vld [vmem:[%s453 + $0x8] sm:$0xff]
      %v465 = vld [vmem:[%s414] sm:$0xf]
      %v466 = vld [vmem:[%s414 + $0x4] sm:$0xf]
      %v467 = vld [vmem:[%s414 + $0x8] sm:$0xf]
      %v468 = vld [vmem:[%s414 + $0xc] sm:$0xf]
      %v469 = vld [vmem:[%s414 + $0x10] sm:$0xf]
      %v470 = vld [vmem:[%s414 + $0x14] sm:$0xf]
      %v471 = vld [vmem:[%s414 + $0x18] sm:$0xf]
      %v472 = vld [vmem:[%s414 + $0x1c] sm:$0xf]
      %v473 = vld [vmem:[%s420] sm:$0xf]
      %v474 = vld [vmem:[%s420 + $0x4] sm:$0xf]
      %v483 = vunpack.c.l.b16 %v465
      %v484 = vunpack.c.l.b16 %v466
      %v485 = vunpack.c.l.b16 %v467
      %v486 = vunpack.c.l.b16 %v468
      %v487 = vunpack.c.l.b16 %v469
      %v488 = vunpack.c.l.b16 %v470
      %v489 = vunpack.c.l.b16 %v471
      %v490 = vunpack.c.l.b16 %v472
      %v491 = vpack.c.b16 %v484, %v483
      %v492 = vpack.c.b16 %v486, %v485
      %v493 = vpack.c.b16 %v488, %v487
      %v494 = vpack.c.b16 %v490, %v489
      %v497 = vunpack.c.l.b16 %v473
      %v498 = vunpack.c.l.b16 %v474
      %v499 = vpack.c.b16 %v498, %v497
      %vm501 = vcmask 130048
      %v503 = vsel %vm501, %v491, 0
      %v506 = vsel %vm501, %v492, 0
      %v509 = vsel %vm501, %v493, 0
      %v512 = vsel %vm501, %v494, 0
      %514 = vmatpush.bf16.msra.mxu0 0
      %515 = vmatpush.bf16.msra.mxu0 0
      %516 = vmatpush.bf16.msra.mxu0 0
      %517 = vmatpush.bf16.msra.mxu0 0
      %518 = vmatpush.bf16.msra.mxu0 0
      %519 = vmatpush.bf16.msra.mxu0 0
      %520 = vmatpush.bf16.msra.mxu0 0
      %521 = vmatpush.bf16.msra.mxu0 %v499
      %522 = vmatmul.bf16.gmra.mxu0 %v503
      %v523 = vpop.f32.mrf.mxu0
      %v524 = vadd.f32 0.0, %v523
      %v525 = vpop.f32.mrf.mxu0
      %v526 = vadd.f32 0.0, %v525
      %527 = vmatmul.bf16.gmra.mxu0 %v506
      %v528 = vpop.f32.mrf.mxu0
      %v529 = vadd.f32 0.0, %v528
      %v530 = vpop.f32.mrf.mxu0
      %v531 = vadd.f32 0.0, %v530
      %532 = vmatmul.bf16.gmra.mxu0 %v509
      %v533 = vpop.f32.mrf.mxu0
      %v534 = vadd.f32 0.0, %v533
      %v535 = vpop.f32.mrf.mxu0
      %v536 = vadd.f32 0.0, %v535
      %537 = vmatmul.bf16.gmra.mxu0 %v512
      %v538 = vpop.f32.mrf.mxu0
      %v539 = vadd.f32 0.0, %v538
      %v540 = vpop.f32.mrf.mxu0
      %v541 = vadd.f32 0.0, %v540
      %542 = vdwg.mxu0
      %vm543 = vcmask 523264
      %v544 = vsel %vm543, %v524, -inf
      %545 = vmax.xlane.f32.xlu0 %v544
      %v546 = vpop.xlane.xlu0 %545
      %v547 = vsel %vm543, %v526, -inf
      %548 = vmax.xlane.f32.xlu0 %v547
      %v549 = vpop.xlane.xlu0 %548
      %v550 = vsel %vm543, %v529, -inf
      %551 = vmax.xlane.f32.xlu0 %v550
      %v552 = vpop.xlane.xlu0 %551
      %v553 = vsel %vm543, %v531, -inf
      %554 = vmax.xlane.f32.xlu0 %v553
      %v555 = vpop.xlane.xlu0 %554
      %v556 = vsel %vm543, %v534, -inf
      %557 = vmax.xlane.f32.xlu0 %v556
      %v558 = vpop.xlane.xlu0 %557
      %v559 = vsel %vm543, %v536, -inf
      %560 = vmax.xlane.f32.xlu0 %v559
      %v561 = vpop.xlane.xlu0 %560
      %v562 = vsel %vm543, %v539, -inf
      %563 = vmax.xlane.f32.xlu0 %v562
      %v564 = vpop.xlane.xlu0 %563
      %v565 = vsel %vm543, %v541, -inf
      %566 = vmax.xlane.f32.xlu0 %v565
      %v567 = vpop.xlane.xlu0 %566
      %v568 = vsub.f32 %v524, %v546
      %v569 = vsub.f32 %v526, %v549
      %v570 = vsub.f32 %v529, %v552
      %v571 = vsub.f32 %v531, %v555
      %v572 = vsub.f32 %v534, %v558
      %v573 = vsub.f32 %v536, %v561
      %v574 = vsub.f32 %v539, %v564
      %v575 = vsub.f32 %v541, %v567
      %v576 = vmul.f32 %v568, 1.442695
      %v577 = vpow.pop %v576
      %v578 = vmul.f32 %v569, 1.442695
      %v579 = vpow.pop %v578
      %v580 = vmul.f32 %v570, 1.442695
      %v581 = vpow.pop %v580
      %v582 = vmul.f32 %v571, 1.442695
      %v583 = vpow.pop %v582
      %v584 = vmul.f32 %v572, 1.442695
      %v585 = vpow.pop %v584
      %v586 = vmul.f32 %v573, 1.442695
      %v587 = vpow.pop %v586
      %v588 = vmul.f32 %v574, 1.442695
      %v589 = vpow.pop %v588
      %v590 = vmul.f32 %v575, 1.442695
      %v591 = vpow.pop %v590
      %v592 = vsel %vm543, %v577, 0.0
      %593 = vadd.xlane.f32.xlu0 %v592
      %v594 = vpop.xlane.xlu0 %593
      %v595 = vsel %vm543, %v579, 0.0
      %596 = vadd.xlane.f32.xlu0 %v595
      %v597 = vpop.xlane.xlu0 %596
      %v598 = vsel %vm543, %v581, 0.0
      %599 = vadd.xlane.f32.xlu0 %v598
      %v600 = vpop.xlane.xlu0 %599
      %v601 = vsel %vm543, %v583, 0.0
      %602 = vadd.xlane.f32.xlu0 %v601
      %v603 = vpop.xlane.xlu0 %602
      %v604 = vsel %vm543, %v585, 0.0
      %605 = vadd.xlane.f32.xlu0 %v604
      %v606 = vpop.xlane.xlu0 %605
      %v607 = vsel %vm543, %v587, 0.0
      %608 = vadd.xlane.f32.xlu0 %v607
      %v609 = vpop.xlane.xlu0 %608
      %v610 = vsel %vm543, %v589, 0.0
      %611 = vadd.xlane.f32.xlu0 %v610
      %v612 = vpop.xlane.xlu0 %611
      %v613 = vsel %vm543, %v591, 0.0
      %614 = vadd.xlane.f32.xlu0 %v613
      %v615 = vpop.xlane.xlu0 %614
      %v616 = vpack.c.bf16 %v579, %v577
      %v617 = vpack.c.bf16 %v583, %v581
      %v618 = vpack.c.bf16 %v587, %v585
      %v619 = vpack.c.bf16 %v591, %v589
      %v620 = vrcp.pop %v594
      %v621 = vrcp.pop %v597
      %v622 = vrcp.pop %v600
      %v623 = vrcp.pop %v603
      %v624 = vrcp.pop %v606
      %v625 = vrcp.pop %v609
      %v626 = vrcp.pop %v612
      %v627 = vrcp.pop %v615
      %v628 = vld [vmem:[%s425] sm:$0xf]
      %v629 = vld [vmem:[%s425 + $0x4] sm:$0xf]
      %v632 = vunpack.c.l.b16 %v628
      %v633 = vunpack.c.l.b16 %v629
      %v634 = vpack.c.b16 %v633, %v632
      %v636 = vsel %vm543, %v634, 0
      %v639 = vsel %vm543, %v616, 0
      %v642 = vsel %vm543, %v617, 0
      %v645 = vsel %vm543, %v618, 0
      %v648 = vsel %vm543, %v619, 0
      %650 = vmatpush.bf16.xpose.msra.mxu0 0
      %651 = vmatpush.bf16.xpose.msra.mxu0 0
      %652 = vmatpush.bf16.xpose.msra.mxu0 0
      %653 = vmatpush.bf16.xpose.msra.mxu0 0
      %654 = vmatpush.bf16.xpose.msra.mxu0 %v648
      %655 = vmatpush.bf16.xpose.msra.mxu0 %v645
      %656 = vmatpush.bf16.xpose.msra.mxu0 %v642
      %657 = vmatpush.bf16.xpose.msra.mxu0 %v639
      %658 = vmatmul.bf16.gmra.mxu0 %v636
      %v659 = vpop.f32.mrf.mxu0
      %v660 = vadd.f32 0.0, %v659
      %v661 = vpop.f32.mrf.mxu0
      %v662 = vadd.f32 0.0, %v661
      %663 = vdwg.mxu0
      %664 = vxpose.xlu0.b32.start [1/16] %v620, 128
      %665 = vxpose.xlu0.b32.cont [2/16] %v621, 128
      %666 = vxpose.xlu0.b32.cont [3/16] %v622, 128
      %667 = vxpose.xlu0.b32.cont [4/16] %v623, 128
      %668 = vxpose.xlu0.b32.cont [5/16] %v624, 128
      %669 = vxpose.xlu0.b32.cont [6/16] %v625, 128
      %670 = vxpose.xlu0.b32.cont [7/16] %v626, 128
      %671 = vxpose.xlu0.b32.cont [8/16] %v627, 128
      %672 = vxpose.xlu0.b32.cont [9/16] 0.0, 128
      %673 = vxpose.xlu0.b32.cont [10/16] 0.0, 128
      %674 = vxpose.xlu0.b32.cont [11/16] 0.0, 128
      %675 = vxpose.xlu0.b32.cont [12/16] 0.0, 128
      %676 = vxpose.xlu0.b32.cont [13/16] 0.0, 128
      %677 = vxpose.xlu0.b32.cont [14/16] 0.0, 128
      %678 = vxpose.xlu0.b32.cont [15/16] 0.0, 128
      %679 = vxpose.xlu0.b32.end [16/16] 0.0, 128
      %v680 = vpop.trf.xlu0
      %v681 = vpop.trf.xlu0
      %v682 = vpop.trf.xlu0
      %v683 = vpop.trf.xlu0
      %v684 = vpop.trf.xlu0
      %v685 = vpop.trf.xlu0
      %v686 = vpop.trf.xlu0
      %v687 = vpop.trf.xlu0
      %v688 = vpop.trf.xlu0
      %v689 = vpop.trf.xlu0
      %v690 = vpop.trf.xlu0
      %v691 = vpop.trf.xlu0
      %v692 = vpop.trf.xlu0
      %v693 = vpop.trf.xlu0
      %v694 = vpop.trf.xlu0
      %v695 = vpop.trf.xlu0
      %v696 = vperm.slane %v680, 0
      %v697 = vmul.f32 %v660, %v696
      %v698 = vmul.f32 %v662, %v696
      %v699 = vadd.f32 %v463, %v697
      %v700 = vadd.f32 %v464, %v698
      %701 = vst.msk [vmem:[%s461] sm:$0xff] %vm543, %v699
      %702 = vst.msk [vmem:[%s461 + $0x8] sm:$0xff] %vm543, %v700
      %v703 = vld [vmem:[%s461] sm:$0xff]
      %v704 = vld [vmem:[%s461 + $0x8] sm:$0xff]
      %v705 = vld [vmem:[%s434] sm:$0xf]
      %v706 = vld [vmem:[%s434 + $0x4] sm:$0xf]
      %v707 = vld [vmem:[%s434 + $0x8] sm:$0xf]
      %v708 = vld [vmem:[%s434 + $0xc] sm:$0xf]
      %v709 = vld [vmem:[%s434 + $0x10] sm:$0xf]
      %v710 = vld [vmem:[%s434 + $0x14] sm:$0xf]
      %v711 = vld [vmem:[%s434 + $0x18] sm:$0xf]
      %v712 = vld [vmem:[%s434 + $0x1c] sm:$0xf]
      %v713 = vld [vmem:[%s440] sm:$0xf]
      %v714 = vld [vmem:[%s440 + $0x4] sm:$0xf]
      %v723 = vunpack.c.l.b16 %v705
      %v724 = vunpack.c.l.b16 %v706
      %v725 = vunpack.c.l.b16 %v707
      %v726 = vunpack.c.l.b16 %v708
      %v727 = vunpack.c.l.b16 %v709
      %v728 = vunpack.c.l.b16 %v710
      %v729 = vunpack.c.l.b16 %v711
      %v730 = vunpack.c.l.b16 %v712
      %v731 = vpack.c.b16 %v724, %v723
      %v732 = vpack.c.b16 %v726, %v725
      %v733 = vpack.c.b16 %v728, %v727
      %v734 = vpack.c.b16 %v730, %v729
      %v737 = vunpack.c.l.b16 %v713
      %v738 = vunpack.c.l.b16 %v714
      %v739 = vpack.c.b16 %v738, %v737
      %v742 = vsel %vm501, %v731, 0
      %v745 = vsel %vm501, %v732, 0
      %v748 = vsel %vm501, %v733, 0
      %v751 = vsel %vm501, %v734, 0
      %753 = vmatpush.bf16.msra.mxu0 0
      %754 = vmatpush.bf16.msra.mxu0 0
      %755 = vmatpush.bf16.msra.mxu0 0
      %756 = vmatpush.bf16.msra.mxu0 0
      %757 = vmatpush.bf16.msra.mxu0 0
      %758 = vmatpush.bf16.msra.mxu0 0
      %759 = vmatpush.bf16.msra.mxu0 0
      %760 = vmatpush.bf16.msra.mxu0 %v739
      %761 = vmatmul.bf16.gmra.mxu0 %v742
      %v762 = vpop.f32.mrf.mxu0
      %v763 = vadd.f32 0.0, %v762
      %v764 = vpop.f32.mrf.mxu0
      %v765 = vadd.f32 0.0, %v764
      %766 = vmatmul.bf16.gmra.mxu0 %v745
      %v767 = vpop.f32.mrf.mxu0
      %v768 = vadd.f32 0.0, %v767
      %v769 = vpop.f32.mrf.mxu0
      %v770 = vadd.f32 0.0, %v769
      %771 = vmatmul.bf16.gmra.mxu0 %v748
      %v772 = vpop.f32.mrf.mxu0
      %v773 = vadd.f32 0.0, %v772
      %v774 = vpop.f32.mrf.mxu0
      %v775 = vadd.f32 0.0, %v774
      %776 = vmatmul.bf16.gmra.mxu0 %v751
      %v777 = vpop.f32.mrf.mxu0
      %v778 = vadd.f32 0.0, %v777
      %v779 = vpop.f32.mrf.mxu0
      %v780 = vadd.f32 0.0, %v779
      %781 = vdwg.mxu0
      %v782 = vsel %vm543, %v763, -inf
      %783 = vmax.xlane.f32.xlu0 %v782
      %v784 = vpop.xlane.xlu0 %783
      %v785 = vsel %vm543, %v765, -inf
      %786 = vmax.xlane.f32.xlu0 %v785
      %v787 = vpop.xlane.xlu0 %786
      %v788 = vsel %vm543, %v768, -inf
      %789 = vmax.xlane.f32.xlu0 %v788
      %v790 = vpop.xlane.xlu0 %789
      %v791 = vsel %vm543, %v770, -inf
      %792 = vmax.xlane.f32.xlu0 %v791
      %v793 = vpop.xlane.xlu0 %792
      %v794 = vsel %vm543, %v773, -inf
      %795 = vmax.xlane.f32.xlu0 %v794
      %v796 = vpop.xlane.xlu0 %795
      %v797 = vsel %vm543, %v775, -inf
      %798 = vmax.xlane.f32.xlu0 %v797
      %v799 = vpop.xlane.xlu0 %798
      %v800 = vsel %vm543, %v778, -inf
      %801 = vmax.xlane.f32.xlu0 %v800
      %v802 = vpop.xlane.xlu0 %801
      %v803 = vsel %vm543, %v780, -inf
      %804 = vmax.xlane.f32.xlu0 %v803
      %v805 = vpop.xlane.xlu0 %804
      %v806 = vsub.f32 %v763, %v784
      %v807 = vsub.f32 %v765, %v787
      %v808 = vsub.f32 %v768, %v790
      %v809 = vsub.f32 %v770, %v793
      %v810 = vsub.f32 %v773, %v796
      %v811 = vsub.f32 %v775, %v799
      %v812 = vsub.f32 %v778, %v802
      %v813 = vsub.f32 %v780, %v805
      %v814 = vmul.f32 %v806, 1.442695
      %v815 = vpow.pop %v814
      %v816 = vmul.f32 %v807, 1.442695
      %v817 = vpow.pop %v816
      %v818 = vmul.f32 %v808, 1.442695
      %v819 = vpow.pop %v818
      %v820 = vmul.f32 %v809, 1.442695
      %v821 = vpow.pop %v820
      %v822 = vmul.f32 %v810, 1.442695
      %v823 = vpow.pop %v822
      %v824 = vmul.f32 %v811, 1.442695
      %v825 = vpow.pop %v824
      %v826 = vmul.f32 %v812, 1.442695
      %v827 = vpow.pop %v826
      %v828 = vmul.f32 %v813, 1.442695
      %v829 = vpow.pop %v828
      %v830 = vsel %vm543, %v815, 0.0
      %831 = vadd.xlane.f32.xlu0 %v830
      %v832 = vpop.xlane.xlu0 %831
      %v833 = vsel %vm543, %v817, 0.0
      %834 = vadd.xlane.f32.xlu0 %v833
      %v835 = vpop.xlane.xlu0 %834
      %v836 = vsel %vm543, %v819, 0.0
      %837 = vadd.xlane.f32.xlu0 %v836
      %v838 = vpop.xlane.xlu0 %837
      %v839 = vsel %vm543, %v821, 0.0
      %840 = vadd.xlane.f32.xlu0 %v839
      %v841 = vpop.xlane.xlu0 %840
      %v842 = vsel %vm543, %v823, 0.0
      %843 = vadd.xlane.f32.xlu0 %v842
      %v844 = vpop.xlane.xlu0 %843
      %v845 = vsel %vm543, %v825, 0.0
      %846 = vadd.xlane.f32.xlu0 %v845
      %v847 = vpop.xlane.xlu0 %846
      %v848 = vsel %vm543, %v827, 0.0
      %849 = vadd.xlane.f32.xlu0 %v848
      %v850 = vpop.xlane.xlu0 %849
      %v851 = vsel %vm543, %v829, 0.0
      %852 = vadd.xlane.f32.xlu0 %v851
      %v853 = vpop.xlane.xlu0 %852
      %v854 = vpack.c.bf16 %v817, %v815
      %v855 = vpack.c.bf16 %v821, %v819
      %v856 = vpack.c.bf16 %v825, %v823
      %v857 = vpack.c.bf16 %v829, %v827
      %v858 = vrcp.pop %v832
      %v859 = vrcp.pop %v835
      %v860 = vrcp.pop %v838
      %v861 = vrcp.pop %v841
      %v862 = vrcp.pop %v844
      %v863 = vrcp.pop %v847
      %v864 = vrcp.pop %v850
      %v865 = vrcp.pop %v853
      %v866 = vld [vmem:[%s445] sm:$0xf]
      %v867 = vld [vmem:[%s445 + $0x4] sm:$0xf]
      %v870 = vunpack.c.l.b16 %v866
      %v871 = vunpack.c.l.b16 %v867
      %v872 = vpack.c.b16 %v871, %v870
      %v874 = vsel %vm543, %v872, 0
      %v877 = vsel %vm543, %v854, 0
      %v880 = vsel %vm543, %v855, 0
      %v883 = vsel %vm543, %v856, 0
      %v886 = vsel %vm543, %v857, 0
      %888 = vmatpush.bf16.xpose.msra.mxu0 0
      %889 = vmatpush.bf16.xpose.msra.mxu0 0
      %890 = vmatpush.bf16.xpose.msra.mxu0 0
      %891 = vmatpush.bf16.xpose.msra.mxu0 0
      %892 = vmatpush.bf16.xpose.msra.mxu0 %v886
      %893 = vmatpush.bf16.xpose.msra.mxu0 %v883
      %894 = vmatpush.bf16.xpose.msra.mxu0 %v880
      %895 = vmatpush.bf16.xpose.msra.mxu0 %v877
      %896 = vmatmul.bf16.gmra.mxu0 %v874
      %v897 = vpop.f32.mrf.mxu0
      %v898 = vadd.f32 0.0, %v897
      %v899 = vpop.f32.mrf.mxu0
      %v900 = vadd.f32 0.0, %v899
      %901 = vdwg.mxu0
      %902 = vxpose.xlu0.b32.start [1/16] %v858, 128
      %903 = vxpose.xlu0.b32.cont [2/16] %v859, 128
      %904 = vxpose.xlu0.b32.cont [3/16] %v860, 128
      %905 = vxpose.xlu0.b32.cont [4/16] %v861, 128
      %906 = vxpose.xlu0.b32.cont [5/16] %v862, 128
      %907 = vxpose.xlu0.b32.cont [6/16] %v863, 128
      %908 = vxpose.xlu0.b32.cont [7/16] %v864, 128
      %909 = vxpose.xlu0.b32.cont [8/16] %v865, 128
      %910 = vxpose.xlu0.b32.cont [9/16] 0.0, 128
      %911 = vxpose.xlu0.b32.cont [10/16] 0.0, 128
      %912 = vxpose.xlu0.b32.cont [11/16] 0.0, 128
      %913 = vxpose.xlu0.b32.cont [12/16] 0.0, 128
      %914 = vxpose.xlu0.b32.cont [13/16] 0.0, 128
      %915 = vxpose.xlu0.b32.cont [14/16] 0.0, 128
      %916 = vxpose.xlu0.b32.cont [15/16] 0.0, 128
      %917 = vxpose.xlu0.b32.end [16/16] 0.0, 128
      %v918 = vpop.trf.xlu0
      %v919 = vpop.trf.xlu0
      %v920 = vpop.trf.xlu0
      %v921 = vpop.trf.xlu0
      %v922 = vpop.trf.xlu0
      %v923 = vpop.trf.xlu0
      %v924 = vpop.trf.xlu0
      %v925 = vpop.trf.xlu0
      %v926 = vpop.trf.xlu0
      %v927 = vpop.trf.xlu0
      %v928 = vpop.trf.xlu0
      %v929 = vpop.trf.xlu0
      %v930 = vpop.trf.xlu0
      %v931 = vpop.trf.xlu0
      %v932 = vpop.trf.xlu0
      %v933 = vpop.trf.xlu0
      %v934 = vperm.slane %v918, 0
      %v935 = vmul.f32 %v898, %v934
      %v936 = vmul.f32 %v900, %v934
      %v937 = vadd.f32 %v703, %v935
      %v938 = vadd.f32 %v704, %v936
      %939 = vst.msk [vmem:[%s461] sm:$0xff] %vm543, %v937
      %940 = vst.msk [vmem:[%s461 + $0x8] sm:$0xff] %vm543, %v938
      %p941 = scmp.lt.s32.totalorder %s22, 1
      %s942 = scalar_select %p941, %s22, 1
      %p943 = scmp.lt.s32.totalorder %s23, 0
      %s944 = scalar_select %p943, %s23, 0
      %s945 = smul.addr %s942, 2
      %s946 = sadd.s32 %s944, %s945
      %s947 = smul.addr %s946, 8
      %s948 = scalar_lea.vmem %s7, %s947
      // Predicated region
      $region49: #{_lambda_.1} parent=47 // pred_check
        %p949 = pneg %p238
      $region50: #{_lambda_.1} parent=47 // pred_check_branch
        %951 = sbr.rel (%p949) target = $region52
      $region51: #{_lambda_.1} parent=47 // pred_region
        _
      $region52: #{_lambda_.1} parent=47 // pred_fallthru
        _
    $region48: #{_lambda_.1} parent=5 // pred_fallthru
      _
    %p952 = scmp.le.s32.totalorder 2, %s13
    // Predicated region
    $region53: #{_lambda_.1} parent=5 // pred_check
      %p953 = pneg %p952
    $region54: #{_lambda_.1} parent=5 // pred_check_branch
      %955 = sbr.rel (%p953) target = $region56
    $region55: #{_lambda_.1} parent=5 // pred_region
      %s956 = ssub.s32 %s13, 2
      // Predicated region
      $region57: #{_lambda_.1} parent=55 // pred_check
        %p957 = pneg %p244
      $region58: #{_lambda_.1} parent=55 // pred_check_branch
        %959 = sbr.rel (%p957) target = $region60
      $region59: #{_lambda_.1} parent=55 // pred_region
        %p960 = scmp.lt.s32.totalorder %s24, 1
        %s961 = scalar_select %p960, %s24, 1
        %p962 = scmp.lt.s32.totalorder %s25, 0
        %s963 = scalar_select %p962, %s25, 0
        %s964 = smul.addr %s961, 2
        %s965 = sadd.s32 %s963, %s964
        %s966 = smul.addr %s965, 8
        %s967 = scalar_lea.vmem %s7, %s966
      $region60: #{_lambda_.1} parent=55 // pred_fallthru
        _
    $region56: #{_lambda_.1} parent=5 // pred_fallthru
      _
  $region6: #{_lambda_.1} parent=0 // loop_footer
    %s17 = sadd.s32 1, %s13
  $region7: #{_lambda_.1} parent=0 // loop_footer_branch
    %12 = sbr.rel target = $region3
  $region8: #{_lambda_.1} parent=0 // loop_exit
    _

</llo_original>
